<compile_context>
chip_gen: v7x
topology: tpu7x:2x2x1
jax: 0.10.0
libtpu: 0.0.40
codegen_flags: <defaults>
</compile_context>

<pallas_src>
import functools
import numpy as np
import jax
import jax.numpy as jnp
from jax import lax
from jax.experimental import pallas as pl
from jax.experimental.pallas import tpu as pltpu


def _log_sigmoid(x):
    # numerically stable log(sigmoid(x)) = min(x, 0) - log1p(exp(-|x|))
    return jnp.minimum(x, 0.0) - jnp.log1p(jnp.exp(-jnp.abs(x)))


def _round_up(x, m):
    return ((x + m - 1) // m) * m


# ---------------------------------------------------------------------------
# Kernel: per batch tile, gather embedding rows from HBM via manual DMA and
# compute the tile's contribution to  sum( logsig(u.v) + logsig(-u.sum_k nv_k) ).
# ---------------------------------------------------------------------------
@functools.lru_cache(maxsize=None)
def _make_kernel(tile_b, d_pad, neg_num, batch_size):
    K = neg_num

    def kernel(centers_ref, contexts_ref, negctx_ref,   # scalar prefetch (SMEM, int32)
               emb_hbm,                                 # (V, d_pad) f32 in HBM (pl.ANY)
               out_ref,                                 # (1, 8, 128) f32 per-tile partial
               u_buf, v_buf, neg_buf, sems):            # VMEM scratch + DMA sems
        b0 = pl.program_id(0) * tile_b

        def row_copy(row_idx, dst, sem):
            return pltpu.make_async_copy(emb_hbm.at[pl.ds(row_idx, 1), :], dst, sem)

        # ---- issue all row-gather DMAs for this tile (they run concurrently) ----
        @pl.loop(0, tile_b)
        def _issue(r):
            row_copy(centers_ref[b0 + r], u_buf.at[pl.ds(r, 1), :], sems.at[0]).start()
            row_copy(contexts_ref[b0 + r], v_buf.at[pl.ds(r, 1), :], sems.at[1]).start()
            for k in range(K):
                row_copy(negctx_ref[(b0 + r) * K + k],
                         neg_buf.at[k, pl.ds(r, 1), :], sems.at[2 + k]).start()

        # ---- wait for completion (same sizes per stream, shared sem balances) ----
        @pl.loop(0, tile_b)
        def _wait(r):
            row_copy(0, u_buf.at[pl.ds(r, 1), :], sems.at[0]).wait()
            row_copy(0, v_buf.at[pl.ds(r, 1), :], sems.at[1]).wait()
            for k in range(K):
                row_copy(0, neg_buf.at[k, pl.ds(r, 1), :], sems.at[2 + k]).wait()

        # ---- compute (lane-dense: full 128-lane rows) ----------------------------
        u = u_buf[...]                                           # (tile_b, d_pad)
        v = v_buf[...]                                           # (tile_b, d_pad)
        pos_score = jnp.sum(u * v, axis=-1, keepdims=True)       # (tile_b, 1)
        loss = _log_sigmoid(pos_score)
        if K > 0:
            nv_sum = jnp.sum(neg_buf[...], axis=0)               # (tile_b, d_pad)
            neg_score = jnp.sum(u * nv_sum, axis=-1, keepdims=True)
            loss = loss + _log_sigmoid(-neg_score)
        # mask out batch-padding rows (batch rounded up to tile_b)
        rows = b0 + lax.broadcasted_iota(jnp.int32, (tile_b, 1), 0)
        loss = jnp.where(rows < batch_size, loss, 0.0)

        partial = jnp.sum(loss)
        out_ref[...] = jnp.broadcast_to(partial, out_ref.shape).astype(jnp.float32)

    return kernel


# ---------------------------------------------------------------------------
# Wrapper: pads indices to a whole number of tiles, launches one gridded call.
# ---------------------------------------------------------------------------
def skipgram_loss(emb_padded, centers, contexts, neg_contexts, *, neg_num, tile_b=None):
    batch = centers.shape[0]
    d_pad = emb_padded.shape[1]
    if tile_b is None:
        # bigger tiles amortize per-step overhead; cap keeps the number of
        # in-flight row DMAs / shared-sem pressure modest.
        tile_b = min(_round_up(batch, 8), 64)
    num_tiles = pl.cdiv(batch, tile_b)
    b_pad = num_tiles * tile_b

    centers_p = jnp.pad(centers.astype(jnp.int32), (0, b_pad - batch))
    contexts_p = jnp.pad(contexts.astype(jnp.int32), (0, b_pad - batch))
    K = int(neg_num)
    if K > 0:
        neg_flat = jnp.pad(neg_contexts.astype(jnp.int32).reshape(-1),
                           (0, (b_pad - batch) * K))
    else:
        neg_flat = jnp.zeros((1,), jnp.int32)   # dummy prefetch arg, unused
    k_eff = max(K, 1)

    kernel = _make_kernel(tile_b, d_pad, K, batch)
    partials = pl.pallas_call(
        kernel,
        out_shape=jax.ShapeDtypeStruct((num_tiles, 8, 128), jnp.float32),
        grid_spec=pltpu.PrefetchScalarGridSpec(
            num_scalar_prefetch=3,
            grid=(num_tiles,),
            in_specs=[pl.BlockSpec(memory_space=pl.ANY)],        # embedding table (HBM)
            out_specs=pl.BlockSpec((1, 8, 128), lambda i, *prefetch: (i, 0, 0)),
            scratch_shapes=[
                pltpu.VMEM((tile_b, d_pad), jnp.float32),        # center rows
                pltpu.VMEM((tile_b, d_pad), jnp.float32),        # context rows
                pltpu.VMEM((k_eff, tile_b, d_pad), jnp.float32), # negative rows
                pltpu.SemaphoreType.DMA((2 + k_eff,)),
            ]),
        compiler_params=pltpu.CompilerParams(
            dimension_semantics=("parallel",)),
    )(centers_p, contexts_p, neg_flat, emb_padded)

    # tiny final reduction + negation in JAX (per-tile partials are independent)
    return -jnp.sum(partials[:, 0, 0])


# ---------------------------------------------------------------------------
# Model wrapper (parameter init + negative sampling glue in plain JAX)
# ---------------------------------------------------------------------------
class SkipGramModelPallas:
    def __init__(self, key, vocabulary_size, embedding_dim, neg_num=0, word_count=()):
        self.neg_num = neg_num
        self.vocabulary_size = vocabulary_size
        self.embedding_dim = embedding_dim
        initrange = 0.5 / embedding_dim
        emb = jax.random.uniform(
            key, (vocabulary_size, embedding_dim),
            minval=-initrange, maxval=initrange, dtype=jnp.float32)
        self.embeddings = emb
        # lane-dense layout: pad feature dim to a multiple of 128 once at init
        d_pad = _round_up(embedding_dim, 128)
        self.embeddings_padded = jnp.pad(emb, ((0, 0), (0, d_pad - embedding_dim)))
        if neg_num > 0:
            # Equivalent of create_sample_table(): sample proportional to
            # freq**0.75 without materializing the 1e8-entry table.
            freq = np.power(np.asarray(word_count, dtype=np.float64), 0.75)
            self.sample_probs = jnp.asarray(freq / freq.sum(), dtype=jnp.float32)

    def forward(self, centers, contexts, sample_key=None):
        batch = centers.shape[0]
        if self.neg_num > 0:
            neg_contexts = jax.random.choice(
                sample_key, self.vocabulary_size,
                shape=(batch, self.neg_num), p=self.sample_probs)
        else:
            neg_contexts = None
        return skipgram_loss(self.embeddings_padded, centers, contexts,
                             neg_contexts, neg_num=self.neg_num)

    def get_embeddings(self):
        return self.embeddings


# ---------------------------------------------------------------------------
if __name__ == "__main__":
    key = jax.random.PRNGKey(0)
    k_emb, k_centers, k_contexts, k_neg = jax.random.split(key, 4)

    vocab_size = 64
    embedding_dim = 32
    batch_size = 8
    neg_num = 4
    word_count = list(np.arange(1, vocab_size + 1))   # synthetic frequencies

    model = SkipGramModelPallas(k_emb, vocab_size, embedding_dim,
                                neg_num=neg_num, word_count=word_count)

    centers = jax.random.randint(k_centers, (batch_size,), 0, vocab_size)
    contexts = jax.random.randint(k_contexts, (batch_size,), 0, vocab_size)

    loss = model.forward(centers, contexts, k_neg)
    loss = jax.block_until_ready(loss)

    # --- reference (pure JAX, matches the PyTorch forward) -------------------
    u = model.embeddings[centers]
    v = model.embeddings[contexts]
    neg_ctx = jax.random.choice(k_neg, vocab_size, shape=(batch_size, neg_num),
                                p=model.sample_probs)
    nv = model.embeddings[neg_ctx]
    ref_pos = jax.nn.log_sigmoid(jnp.sum(u * v, axis=-1))
    ref_neg = jax.nn.log_sigmoid(-jnp.sum(jnp.einsum('bd,bkd->bk', u, nv), axis=1))
    ref_loss = -jnp.sum(ref_pos + ref_neg)
    np.testing.assert_allclose(np.asarray(loss), np.asarray(ref_loss),
                               rtol=1e-5, atol=1e-5)

    # --- neg_num == 0 path (PyTorch skips the negative term entirely) --------
    model0 = SkipGramModelPallas(k_emb, vocab_size, embedding_dim, neg_num=0)
    loss0 = jax.block_until_ready(model0.forward(centers, contexts))
    ref_loss0 = -jnp.sum(jax.nn.log_sigmoid(jnp.sum(u * v, axis=-1)))
    np.testing.assert_allclose(np.asarray(loss0), np.asarray(ref_loss0),
                               rtol=1e-5, atol=1e-5)

    print("KERNEL_OK")
</pallas_src>

<mosaic_0001>
module attributes {stable_mosaic.version = 11 : i64} {
  func.func @kernel(%arg0: i32, %arg1: memref<8xi32, #tpu.memory_space<smem>>, %arg2: memref<8xi32, #tpu.memory_space<smem>>, %arg3: memref<32xi32, #tpu.memory_space<smem>>, %arg4: memref<64x128xf32, #tpu.memory_space<any>>, %arg5: memref<1x8x128xf32, #tpu.memory_space<vmem>>, %arg6: memref<8x128xf32, #tpu.memory_space<vmem>>, %arg7: memref<8x128xf32, #tpu.memory_space<vmem>>, %arg8: memref<4x8x128xf32, #tpu.memory_space<vmem>>, %arg9: memref<6x!tpu.dma_semaphore, #tpu.memory_space<semaphore_mem>>) attributes {dimension_semantics = [#tpu.dimension_semantics<parallel>], iteration_bounds = array<i64: 1>, scalar_prefetch = 3 : i64, scratch_operands = 4 : i64, tpu.core_type = #tpu.core_type<tc>, window_params = [{}, {transform_indices = @transform_1, window_bounds = array<i64: 1, 8, 128>}]} {
    %c8_i32 = arith.constant 8 : i32
    %0 = arith.muli %arg0, %c8_i32 : i32
    %c0_i32 = arith.constant 0 : i32
    %c8_i32_0 = arith.constant 8 : i32
    %1 = arith.addi %c0_i32, %c8_i32_0 : i32
    %c1_i32 = arith.constant 1 : i32
    scf.for %arg10 = %c0_i32 to %1 step %c1_i32  : i32 {
      %c1_i32_25 = arith.constant 1 : i32
      %45 = arith.muli %arg10, %c1_i32_25 : i32
      %c0_i32_26 = arith.constant 0 : i32
      %46 = arith.addi %c0_i32_26, %45 : i32
      %47 = arith.addi %0, %46 : i32
      %48 = arith.index_cast %47 : i32 to index
      %49 = memref.load %arg1[%48] : memref<8xi32, #tpu.memory_space<smem>>
      %c0_i32_27 = arith.constant 0 : i32
      %c0_i32_28 = arith.constant 0 : i32
      %50 = tpu.memref_slice %arg4[%49, %c0_i32_28] : memref<64x128xf32, #tpu.memory_space<any>> -> memref<1x128xf32, #tpu.memory_space<any>>
      %c0_i32_29 = arith.constant 0 : i32
      %51 = tpu.memref_slice %arg6[%46, %c0_i32_29] : memref<8x128xf32, #tpu.memory_space<vmem>> -> memref<1x128xf32, #tpu.memory_space<vmem>>
      %52 = tpu.memref_slice %arg9[%c0_i32_27] : memref<6x!tpu.dma_semaphore, #tpu.memory_space<semaphore_mem>> -> memref<1x!tpu.dma_semaphore, #tpu.memory_space<semaphore_mem>>
      %53 = tpu.memref_squeeze %52 : memref<1x!tpu.dma_semaphore, #tpu.memory_space<semaphore_mem>> -> memref<!tpu.dma_semaphore, #tpu.memory_space<semaphore_mem>>
      tpu.enqueue_dma source(%50 : memref<1x128xf32, #tpu.memory_space<any>>) target(%51 : memref<1x128xf32, #tpu.memory_space<vmem>>) target_semaphore(%53 : memref<!tpu.dma_semaphore, #tpu.memory_space<semaphore_mem>>)
      %54 = arith.addi %0, %46 : i32
      %55 = arith.index_cast %54 : i32 to index
      %56 = memref.load %arg2[%55] : memref<8xi32, #tpu.memory_space<smem>>
      %c1_i32_30 = arith.constant 1 : i32
      %c0_i32_31 = arith.constant 0 : i32
      %57 = tpu.memref_slice %arg4[%56, %c0_i32_31] : memref<64x128xf32, #tpu.memory_space<any>> -> memref<1x128xf32, #tpu.memory_space<any>>
      %c0_i32_32 = arith.constant 0 : i32
      %58 = tpu.memref_slice %arg7[%46, %c0_i32_32] : memref<8x128xf32, #tpu.memory_space<vmem>> -> memref<1x128xf32, #tpu.memory_space<vmem>>
      %59 = tpu.memref_slice %arg9[%c1_i32_30] : memref<6x!tpu.dma_semaphore, #tpu.memory_space<semaphore_mem>> -> memref<1x!tpu.dma_semaphore, #tpu.memory_space<semaphore_mem>>
      %60 = tpu.memref_squeeze %59 : memref<1x!tpu.dma_semaphore, #tpu.memory_space<semaphore_mem>> -> memref<!tpu.dma_semaphore, #tpu.memory_space<semaphore_mem>>
      tpu.enqueue_dma source(%57 : memref<1x128xf32, #tpu.memory_space<any>>) target(%58 : memref<1x128xf32, #tpu.memory_space<vmem>>) target_semaphore(%60 : memref<!tpu.dma_semaphore, #tpu.memory_space<semaphore_mem>>)
      %61 = arith.addi %0, %46 : i32
      %c4_i32 = arith.constant 4 : i32
      %62 = arith.muli %61, %c4_i32 : i32
      %c0_i32_33 = arith.constant 0 : i32
      %63 = arith.addi %62, %c0_i32_33 : i32
      %64 = arith.index_cast %63 : i32 to index
      %65 = memref.load %arg3[%64] : memref<32xi32, #tpu.memory_space<smem>>
      %c0_i32_34 = arith.constant 0 : i32
      %c2_i32 = arith.constant 2 : i32
      %c0_i32_35 = arith.constant 0 : i32
      %66 = tpu.memref_slice %arg4[%65, %c0_i32_35] : memref<64x128xf32, #tpu.memory_space<any>> -> memref<1x128xf32, #tpu.memory_space<any>>
      %c0_i32_36 = arith.constant 0 : i32
      %67 = tpu.memref_slice %arg8[%c0_i32_34, %46, %c0_i32_36] : memref<4x8x128xf32, #tpu.memory_space<vmem>> -> memref<1x1x128xf32, #tpu.memory_space<vmem>>
      %68 = tpu.memref_squeeze %67 : memref<1x1x128xf32, #tpu.memory_space<vmem>> -> memref<1x128xf32, #tpu.memory_space<vmem>>
      %69 = tpu.memref_slice %arg9[%c2_i32] : memref<6x!tpu.dma_semaphore, #tpu.memory_space<semaphore_mem>> -> memref<1x!tpu.dma_semaphore, #tpu.memory_space<semaphore_mem>>
      %70 = tpu.memref_squeeze %69 : memref<1x!tpu.dma_semaphore, #tpu.memory_space<semaphore_mem>> -> memref<!tpu.dma_semaphore, #tpu.memory_space<semaphore_mem>>
      tpu.enqueue_dma source(%66 : memref<1x128xf32, #tpu.memory_space<any>>) target(%68 : memref<1x128xf32, #tpu.memory_space<vmem>>) target_semaphore(%70 : memref<!tpu.dma_semaphore, #tpu.memory_space<semaphore_mem>>)
      %71 = arith.addi %0, %46 : i32
      %c4_i32_37 = arith.constant 4 : i32
      %72 = arith.muli %71, %c4_i32_37 : i32
      %c1_i32_38 = arith.constant 1 : i32
      %73 = arith.addi %72, %c1_i32_38 : i32
      %74 = arith.index_cast %73 : i32 to index
      %75 = memref.load %arg3[%74] : memref<32xi32, #tpu.memory_space<smem>>
      %c1_i32_39 = arith.constant 1 : i32
      %c3_i32 = arith.constant 3 : i32
      %c0_i32_40 = arith.constant 0 : i32
      %76 = tpu.memref_slice %arg4[%75, %c0_i32_40] : memref<64x128xf32, #tpu.memory_space<any>> -> memref<1x128xf32, #tpu.memory_space<any>>
      %c0_i32_41 = arith.constant 0 : i32
      %77 = tpu.memref_slice %arg8[%c1_i32_39, %46, %c0_i32_41] : memref<4x8x128xf32, #tpu.memory_space<vmem>> -> memref<1x1x128xf32, #tpu.memory_space<vmem>>
      %78 = tpu.memref_squeeze %77 : memref<1x1x128xf32, #tpu.memory_space<vmem>> -> memref<1x128xf32, #tpu.memory_space<vmem>>
      %79 = tpu.memref_slice %arg9[%c3_i32] : memref<6x!tpu.dma_semaphore, #tpu.memory_space<semaphore_mem>> -> memref<1x!tpu.dma_semaphore, #tpu.memory_space<semaphore_mem>>
      %80 = tpu.memref_squeeze %79 : memref<1x!tpu.dma_semaphore, #tpu.memory_space<semaphore_mem>> -> memref<!tpu.dma_semaphore, #tpu.memory_space<semaphore_mem>>
      tpu.enqueue_dma source(%76 : memref<1x128xf32, #tpu.memory_space<any>>) target(%78 : memref<1x128xf32, #tpu.memory_space<vmem>>) target_semaphore(%80 : memref<!tpu.dma_semaphore, #tpu.memory_space<semaphore_mem>>)
      %81 = arith.addi %0, %46 : i32
      %c4_i32_42 = arith.constant 4 : i32
      %82 = arith.muli %81, %c4_i32_42 : i32
      %c2_i32_43 = arith.constant 2 : i32
      %83 = arith.addi %82, %c2_i32_43 : i32
      %84 = arith.index_cast %83 : i32 to index
      %85 = memref.load %arg3[%84] : memref<32xi32, #tpu.memory_space<smem>>
      %c2_i32_44 = arith.constant 2 : i32
      %c4_i32_45 = arith.constant 4 : i32
      %c0_i32_46 = arith.constant 0 : i32
      %86 = tpu.memref_slice %arg4[%85, %c0_i32_46] : memref<64x128xf32, #tpu.memory_space<any>> -> memref<1x128xf32, #tpu.memory_space<any>>
      %c0_i32_47 = arith.constant 0 : i32
      %87 = tpu.memref_slice %arg8[%c2_i32_44, %46, %c0_i32_47] : memref<4x8x128xf32, #tpu.memory_space<vmem>> -> memref<1x1x128xf32, #tpu.memory_space<vmem>>
      %88 = tpu.memref_squeeze %87 : memref<1x1x128xf32, #tpu.memory_space<vmem>> -> memref<1x128xf32, #tpu.memory_space<vmem>>
      %89 = tpu.memref_slice %arg9[%c4_i32_45] : memref<6x!tpu.dma_semaphore, #tpu.memory_space<semaphore_mem>> -> memref<1x!tpu.dma_semaphore, #tpu.memory_space<semaphore_mem>>
      %90 = tpu.memref_squeeze %89 : memref<1x!tpu.dma_semaphore, #tpu.memory_space<semaphore_mem>> -> memref<!tpu.dma_semaphore, #tpu.memory_space<semaphore_mem>>
      tpu.enqueue_dma source(%86 : memref<1x128xf32, #tpu.memory_space<any>>) target(%88 : memref<1x128xf32, #tpu.memory_space<vmem>>) target_semaphore(%90 : memref<!tpu.dma_semaphore, #tpu.memory_space<semaphore_mem>>)
      %91 = arith.addi %0, %46 : i32
      %c4_i32_48 = arith.constant 4 : i32
      %92 = arith.muli %91, %c4_i32_48 : i32
      %c3_i32_49 = arith.constant 3 : i32
      %93 = arith.addi %92, %c3_i32_49 : i32
      %94 = arith.index_cast %93 : i32 to index
      %95 = memref.load %arg3[%94] : memref<32xi32, #tpu.memory_space<smem>>
      %c3_i32_50 = arith.constant 3 : i32
      %c5_i32 = arith.constant 5 : i32
      %c0_i32_51 = arith.constant 0 : i32
      %96 = tpu.memref_slice %arg4[%95, %c0_i32_51] : memref<64x128xf32, #tpu.memory_space<any>> -> memref<1x128xf32, #tpu.memory_space<any>>
      %c0_i32_52 = arith.constant 0 : i32
      %97 = tpu.memref_slice %arg8[%c3_i32_50, %46, %c0_i32_52] : memref<4x8x128xf32, #tpu.memory_space<vmem>> -> memref<1x1x128xf32, #tpu.memory_space<vmem>>
      %98 = tpu.memref_squeeze %97 : memref<1x1x128xf32, #tpu.memory_space<vmem>> -> memref<1x128xf32, #tpu.memory_space<vmem>>
      %99 = tpu.memref_slice %arg9[%c5_i32] : memref<6x!tpu.dma_semaphore, #tpu.memory_space<semaphore_mem>> -> memref<1x!tpu.dma_semaphore, #tpu.memory_space<semaphore_mem>>
      %100 = tpu.memref_squeeze %99 : memref<1x!tpu.dma_semaphore, #tpu.memory_space<semaphore_mem>> -> memref<!tpu.dma_semaphore, #tpu.memory_space<semaphore_mem>>
      tpu.enqueue_dma source(%96 : memref<1x128xf32, #tpu.memory_space<any>>) target(%98 : memref<1x128xf32, #tpu.memory_space<vmem>>) target_semaphore(%100 : memref<!tpu.dma_semaphore, #tpu.memory_space<semaphore_mem>>)
    }
    %c8_i32_1 = arith.constant 8 : i32
    %c0_i32_2 = arith.constant 0 : i32
    %c8_i32_3 = arith.constant 8 : i32
    %2 = arith.addi %c0_i32_2, %c8_i32_3 : i32
    %c1_i32_4 = arith.constant 1 : i32
    scf.for %arg10 = %c0_i32_2 to %2 step %c1_i32_4  : i32 {
      %c1_i32_25 = arith.constant 1 : i32
      %45 = arith.muli %arg10, %c1_i32_25 : i32
      %c0_i32_26 = arith.constant 0 : i32
      %46 = arith.addi %c0_i32_26, %45 : i32
      %c0_i32_27 = arith.constant 0 : i32
      %c0_i32_28 = arith.constant 0 : i32
      %c0_i32_29 = arith.constant 0 : i32
      %47 = tpu.memref_slice %arg4[%c0_i32_28, %c0_i32_29] : memref<64x128xf32, #tpu.memory_space<any>> -> memref<1x128xf32, #tpu.memory_space<any>>
      %c0_i32_30 = arith.constant 0 : i32
      %48 = tpu.memref_slice %arg6[%46, %c0_i32_30] : memref<8x128xf32, #tpu.memory_space<vmem>> -> memref<1x128xf32, #tpu.memory_space<vmem>>
      %49 = tpu.memref_slice %arg9[%c0_i32_27] : memref<6x!tpu.dma_semaphore, #tpu.memory_space<semaphore_mem>> -> memref<1x!tpu.dma_semaphore, #tpu.memory_space<semaphore_mem>>
      %50 = tpu.memref_squeeze %49 : memref<1x!tpu.dma_semaphore, #tpu.memory_space<semaphore_mem>> -> memref<!tpu.dma_semaphore, #tpu.memory_space<semaphore_mem>>
      tpu.wait_dma2 semaphore(%50 : memref<!tpu.dma_semaphore, #tpu.memory_space<semaphore_mem>>) src(%47 : memref<1x128xf32, #tpu.memory_space<any>>) dst(%48 : memref<1x128xf32, #tpu.memory_space<vmem>>)
      %c1_i32_31 = arith.constant 1 : i32
      %c0_i32_32 = arith.constant 0 : i32
      %c0_i32_33 = arith.constant 0 : i32
      %51 = tpu.memref_slice %arg4[%c0_i32_32, %c0_i32_33] : memref<64x128xf32, #tpu.memory_space<any>> -> memref<1x128xf32, #tpu.memory_space<any>>
      %c0_i32_34 = arith.constant 0 : i32
      %52 = tpu.memref_slice %arg7[%46, %c0_i32_34] : memref<8x128xf32, #tpu.memory_space<vmem>> -> memref<1x128xf32, #tpu.memory_space<vmem>>
      %53 = tpu.memref_slice %arg9[%c1_i32_31] : memref<6x!tpu.dma_semaphore, #tpu.memory_space<semaphore_mem>> -> memref<1x!tpu.dma_semaphore, #tpu.memory_space<semaphore_mem>>
      %54 = tpu.memref_squeeze %53 : memref<1x!tpu.dma_semaphore, #tpu.memory_space<semaphore_mem>> -> memref<!tpu.dma_semaphore, #tpu.memory_space<semaphore_mem>>
      tpu.wait_dma2 semaphore(%54 : memref<!tpu.dma_semaphore, #tpu.memory_space<semaphore_mem>>) src(%51 : memref<1x128xf32, #tpu.memory_space<any>>) dst(%52 : memref<1x128xf32, #tpu.memory_space<vmem>>)
      %c0_i32_35 = arith.constant 0 : i32
      %c2_i32 = arith.constant 2 : i32
      %c0_i32_36 = arith.constant 0 : i32
      %c0_i32_37 = arith.constant 0 : i32
      %55 = tpu.memref_slice %arg4[%c0_i32_36, %c0_i32_37] : memref<64x128xf32, #tpu.memory_space<any>> -> memref<1x128xf32, #tpu.memory_space<any>>
      %c0_i32_38 = arith.constant 0 : i32
      %56 = tpu.memref_slice %arg8[%c0_i32_35, %46, %c0_i32_38] : memref<4x8x128xf32, #tpu.memory_space<vmem>> -> memref<1x1x128xf32, #tpu.memory_space<vmem>>
      %57 = tpu.memref_squeeze %56 : memref<1x1x128xf32, #tpu.memory_space<vmem>> -> memref<1x128xf32, #tpu.memory_space<vmem>>
      %58 = tpu.memref_slice %arg9[%c2_i32] : memref<6x!tpu.dma_semaphore, #tpu.memory_space<semaphore_mem>> -> memref<1x!tpu.dma_semaphore, #tpu.memory_space<semaphore_mem>>
      %59 = tpu.memref_squeeze %58 : memref<1x!tpu.dma_semaphore, #tpu.memory_space<semaphore_mem>> -> memref<!tpu.dma_semaphore, #tpu.memory_space<semaphore_mem>>
      tpu.wait_dma2 semaphore(%59 : memref<!tpu.dma_semaphore, #tpu.memory_space<semaphore_mem>>) src(%55 : memref<1x128xf32, #tpu.memory_space<any>>) dst(%57 : memref<1x128xf32, #tpu.memory_space<vmem>>)
      %c1_i32_39 = arith.constant 1 : i32
      %c3_i32 = arith.constant 3 : i32
      %c0_i32_40 = arith.constant 0 : i32
      %c0_i32_41 = arith.constant 0 : i32
      %60 = tpu.memref_slice %arg4[%c0_i32_40, %c0_i32_41] : memref<64x128xf32, #tpu.memory_space<any>> -> memref<1x128xf32, #tpu.memory_space<any>>
      %c0_i32_42 = arith.constant 0 : i32
      %61 = tpu.memref_slice %arg8[%c1_i32_39, %46, %c0_i32_42] : memref<4x8x128xf32, #tpu.memory_space<vmem>> -> memref<1x1x128xf32, #tpu.memory_space<vmem>>
      %62 = tpu.memref_squeeze %61 : memref<1x1x128xf32, #tpu.memory_space<vmem>> -> memref<1x128xf32, #tpu.memory_space<vmem>>
      %63 = tpu.memref_slice %arg9[%c3_i32] : memref<6x!tpu.dma_semaphore, #tpu.memory_space<semaphore_mem>> -> memref<1x!tpu.dma_semaphore, #tpu.memory_space<semaphore_mem>>
      %64 = tpu.memref_squeeze %63 : memref<1x!tpu.dma_semaphore, #tpu.memory_space<semaphore_mem>> -> memref<!tpu.dma_semaphore, #tpu.memory_space<semaphore_mem>>
      tpu.wait_dma2 semaphore(%64 : memref<!tpu.dma_semaphore, #tpu.memory_space<semaphore_mem>>) src(%60 : memref<1x128xf32, #tpu.memory_space<any>>) dst(%62 : memref<1x128xf32, #tpu.memory_space<vmem>>)
      %c2_i32_43 = arith.constant 2 : i32
      %c4_i32 = arith.constant 4 : i32
      %c0_i32_44 = arith.constant 0 : i32
      %c0_i32_45 = arith.constant 0 : i32
      %65 = tpu.memref_slice %arg4[%c0_i32_44, %c0_i32_45] : memref<64x128xf32, #tpu.memory_space<any>> -> memref<1x128xf32, #tpu.memory_space<any>>
      %c0_i32_46 = arith.constant 0 : i32
      %66 = tpu.memref_slice %arg8[%c2_i32_43, %46, %c0_i32_46] : memref<4x8x128xf32, #tpu.memory_space<vmem>> -> memref<1x1x128xf32, #tpu.memory_space<vmem>>
      %67 = tpu.memref_squeeze %66 : memref<1x1x128xf32, #tpu.memory_space<vmem>> -> memref<1x128xf32, #tpu.memory_space<vmem>>
      %68 = tpu.memref_slice %arg9[%c4_i32] : memref<6x!tpu.dma_semaphore, #tpu.memory_space<semaphore_mem>> -> memref<1x!tpu.dma_semaphore, #tpu.memory_space<semaphore_mem>>
      %69 = tpu.memref_squeeze %68 : memref<1x!tpu.dma_semaphore, #tpu.memory_space<semaphore_mem>> -> memref<!tpu.dma_semaphore, #tpu.memory_space<semaphore_mem>>
      tpu.wait_dma2 semaphore(%69 : memref<!tpu.dma_semaphore, #tpu.memory_space<semaphore_mem>>) src(%65 : memref<1x128xf32, #tpu.memory_space<any>>) dst(%67 : memref<1x128xf32, #tpu.memory_space<vmem>>)
      %c3_i32_47 = arith.constant 3 : i32
      %c5_i32 = arith.constant 5 : i32
      %c0_i32_48 = arith.constant 0 : i32
      %c0_i32_49 = arith.constant 0 : i32
      %70 = tpu.memref_slice %arg4[%c0_i32_48, %c0_i32_49] : memref<64x128xf32, #tpu.memory_space<any>> -> memref<1x128xf32, #tpu.memory_space<any>>
      %c0_i32_50 = arith.constant 0 : i32
      %71 = tpu.memref_slice %arg8[%c3_i32_47, %46, %c0_i32_50] : memref<4x8x128xf32, #tpu.memory_space<vmem>> -> memref<1x1x128xf32, #tpu.memory_space<vmem>>
      %72 = tpu.memref_squeeze %71 : memref<1x1x128xf32, #tpu.memory_space<vmem>> -> memref<1x128xf32, #tpu.memory_space<vmem>>
      %73 = tpu.memref_slice %arg9[%c5_i32] : memref<6x!tpu.dma_semaphore, #tpu.memory_space<semaphore_mem>> -> memref<1x!tpu.dma_semaphore, #tpu.memory_space<semaphore_mem>>
      %74 = tpu.memref_squeeze %73 : memref<1x!tpu.dma_semaphore, #tpu.memory_space<semaphore_mem>> -> memref<!tpu.dma_semaphore, #tpu.memory_space<semaphore_mem>>
      tpu.wait_dma2 semaphore(%74 : memref<!tpu.dma_semaphore, #tpu.memory_space<semaphore_mem>>) src(%70 : memref<1x128xf32, #tpu.memory_space<any>>) dst(%72 : memref<1x128xf32, #tpu.memory_space<vmem>>)
    }
    %c8_i32_5 = arith.constant 8 : i32
    %c0 = arith.constant 0 : index
    %c0_6 = arith.constant 0 : index
    %3 = vector.load %arg6[%c0, %c0_6] : memref<8x128xf32, #tpu.memory_space<vmem>>, vector<8x128xf32>
    %c0_7 = arith.constant 0 : index
    %c0_8 = arith.constant 0 : index
    %4 = vector.load %arg7[%c0_7, %c0_8] : memref<8x128xf32, #tpu.memory_space<vmem>>, vector<8x128xf32>
    %5 = arith.mulf %3, %4 : vector<8x128xf32>
    %cst = arith.constant dense<0.000000e+00> : vector<8xf32>
    %6 = vector.multi_reduction <add>, %5, %cst [1] : vector<8x128xf32> to vector<8xf32>
    %7 = vector.shape_cast %6 : vector<8xf32> to vector<8x1xf32>
    %cst_9 = arith.constant 0.000000e+00 : f32
    %8 = vector.broadcast %cst_9 : f32 to vector<8x1xf32>
    %9 = arith.minimumf %7, %8 : vector<8x1xf32>
    %10 = math.absf %7 : vector<8x1xf32>
    %cst_10 = arith.constant 0.000000e+00 : f32
    %11 = vector.broadcast %cst_10 : f32 to vector<8x1xf32>
    %12 = arith.subf %11, %10 : vector<8x1xf32>
    %13 = math.exp %12 : vector<8x1xf32>
    %14 = math.log1p %13 : vector<8x1xf32>
    %15 = arith.subf %9, %14 : vector<8x1xf32>
    %c0_11 = arith.constant 0 : index
    %c0_12 = arith.constant 0 : index
    %c0_13 = arith.constant 0 : index
    %16 = vector.load %arg8[%c0_11, %c0_12, %c0_13] : memref<4x8x128xf32, #tpu.memory_space<vmem>>, vector<4x8x128xf32>
    %cst_14 = arith.constant dense<0.000000e+00> : vector<8x128xf32>
    %17 = vector.multi_reduction <add>, %16, %cst_14 [0] : vector<4x8x128xf32> to vector<8x128xf32>
    %18 = arith.mulf %3, %17 : vector<8x128xf32>
    %cst_15 = arith.constant dense<0.000000e+00> : vector<8xf32>
    %19 = vector.multi_reduction <add>, %18, %cst_15 [1] : vector<8x128xf32> to vector<8xf32>
    %20 = vector.shape_cast %19 : vector<8xf32> to vector<8x1xf32>
    %cst_16 = arith.constant 0.000000e+00 : f32
    %21 = vector.broadcast %cst_16 : f32 to vector<8x1xf32>
    %22 = arith.subf %21, %20 : vector<8x1xf32>
    %cst_17 = arith.constant 0.000000e+00 : f32
    %23 = vector.broadcast %cst_17 : f32 to vector<8x1xf32>
    %24 = arith.minimumf %22, %23 : vector<8x1xf32>
    %25 = math.absf %22 : vector<8x1xf32>
    %cst_18 = arith.constant 0.000000e+00 : f32
    %26 = vector.broadcast %cst_18 : f32 to vector<8x1xf32>
    %27 = arith.subf %26, %25 : vector<8x1xf32>
    %28 = math.exp %27 : vector<8x1xf32>
    %29 = math.log1p %28 : vector<8x1xf32>
    %30 = arith.subf %24, %29 : vector<8x1xf32>
    %31 = arith.addf %15, %30 : vector<8x1xf32>
    %32 = tpu.iota {dimensions = array<i32: 0>} : vector<8x1xi32>
    %33 = vector.broadcast %0 : i32 to vector<8x1xi32>
    %34 = arith.addi %33, %32 : vector<8x1xi32>
    %c8_i32_19 = arith.constant 8 : i32
    %35 = vector.broadcast %c8_i32_19 : i32 to vector<8x1xi32>
    %36 = arith.cmpi slt, %34, %35 : vector<8x1xi32>
    %cst_20 = arith.constant 0.000000e+00 : f32
    %37 = vector.broadcast %cst_20 : f32 to vector<8x1xf32>
    %38 = arith.select %36, %31, %37 : vector<8x1xi1>, vector<8x1xf32>
    %39 = vector.shape_cast %38 : vector<8x1xf32> to vector<1x8x1xf32>
    %cst_21 = arith.constant dense<0.000000e+00> : vector<1xf32>
    %40 = vector.multi_reduction <add>, %39, %cst_21 [1, 2] : vector<1x8x1xf32> to vector<1xf32>
    %41 = vector.shape_cast %40 : vector<1xf32> to vector<1x1x1xf32>
    %42 = vector.extract %41[0, 0, 0] : f32 from vector<1x1x1xf32>
    %43 = vector.broadcast %42 : f32 to vector<1x8x128xf32>
    %c0_22 = arith.constant 0 : index
    %c0_23 = arith.constant 0 : index
    %c0_24 = arith.constant 0 : index
    %44 = vector.load %arg5[%c0_22, %c0_23, %c0_24] : memref<1x8x128xf32, #tpu.memory_space<vmem>>, vector<1x8x128xf32>
    tpu.vector_store %arg5[%c0_22, %c0_23, %c0_24], %43 {strides = array<i32>} : memref<1x8x128xf32, #tpu.memory_space<vmem>>, vector<1x8x128xf32>,
    return
  }
  func.func @transform_1(%arg0: i32, %arg1: memref<8xi32, #tpu.memory_space<smem>>, %arg2: memref<8xi32, #tpu.memory_space<smem>>, %arg3: memref<32xi32, #tpu.memory_space<smem>>) -> (i32, i32, i32) {
    %c0_i32 = arith.constant 0 : i32
    %c0_i32_0 = arith.constant 0 : i32
    %c0_i32_1 = arith.constant 0 : i32
    return %arg0, %c0_i32, %c0_i32_0 : i32, i32, i32
  }
}

</mosaic_0001>

<llo_original>
// kernel: tpu_custom_call.1
$region0: #{tpu_custom_call.1}
  #allocation0 [shape = 'u32[]', space=smem, size = 0x4, offset = 0x4, fixed_abs, tag = 'smem constant byte address 0x4 - core index']
  #allocation1 [shape = 'u32[144,128]{1,0:T(1,128)}', space=vmem, size = 0x12000, scoped, tag = 'internal scratch']
  #allocation2 [shape = 'f32[8,128]{1,0:T(8,128)}', space=vmem, size = 0x1000, scoped, tag = 'scratch operand']
  #allocation3 [shape = 'f32[8,128]{1,0:T(8,128)}', space=vmem, size = 0x1000, scoped, tag = 'scratch operand']
  #allocation4 [shape = 'f32[4,8,128]{2,1,0:T(8,128)}', space=vmem, size = 0x4000, scoped, tag = 'scratch operand']
  #allocation5 [shape = 's32[6]{0}', space=sflag, size = 0x18, scoped, tag = 'scratch operand']
  #allocation6 [shape = 's32[1]{0}', space=sflag, size = 0x4, scoped, tag = 'scoped memory for tpu_custom_call.1']
  #allocation7 [shape = 'u8[512]{0}', space=smem, size = 0x200, scoped, tag = 'prefetched SMEM operand 0']
  #allocation8 [shape = 'u8[512]{0}', space=smem, size = 0x200, scoped, tag = 'prefetched SMEM operand 1']
  #allocation9 [shape = 'u8[512]{0}', space=smem, size = 0x200, scoped, tag = 'prefetched SMEM operand 2']
  #allocation12 [shape = 's32[]', space=sflag, size = 0x4, offset = 0, fixed_abs, tag = 'sflag constant byte address 0x0 - dummy sync flag']
  #allocation13 [shape = 's32[]', space=sflag, size = 0x4, offset = 0, fixed_abs, tag = 'sflag constant byte address 0x0 - dummy sync flag']
  #allocation14 [shape = 'u32[]', space=smem, size = 0x4, offset = 0x44, fixed_abs, tag = 'smem constant byte address 0x44 - assertion arg 0']
  #allocation15 [shape = 'u32[]', space=smem, size = 0x4, offset = 0x48, fixed_abs, tag = 'smem constant byte address 0x48 - assertion arg 1']
  #allocation16 [shape = 's32[]', space=sflag, size = 0x4, offset = 0, fixed_abs, tag = 'sflag constant byte address 0x0 - dummy sync flag']
  #allocation17 [shape = 's32[]', space=sflag, size = 0x4, offset = 0, fixed_abs, tag = 'sflag constant byte address 0x0 - dummy sync flag']
  #allocation18 [shape = 's32[]', space=sflag, size = 0x4, offset = 0, fixed_abs, tag = 'sflag constant byte address 0x0 - dummy sync flag']
  #allocation19 [shape = 's32[]', space=sflag, size = 0x4, offset = 0, fixed_abs, tag = 'sflag constant byte address 0x0 - dummy sync flag']
  #allocation20 [shape = 's32[]', space=sflag, size = 0x4, offset = 0, fixed_abs, tag = 'sflag constant byte address 0x0 - dummy sync flag']
  #allocation21 [shape = 's32[]', space=sflag, size = 0x4, offset = 0, fixed_abs, tag = 'sflag constant byte address 0x0 - dummy sync flag']
  #allocation22 [shape = 's32[]', space=sflag, size = 0x4, offset = 0, fixed_abs, tag = 'sflag constant byte address 0x0 - dummy sync flag']
  #allocation23 [shape = 's32[]', space=sflag, size = 0x4, offset = 0, fixed_abs, tag = 'sflag constant byte address 0x0 - dummy sync flag']
  #allocation24 [shape = 's32[]', space=sflag, size = 0x4, offset = 0, fixed_abs, tag = 'sflag constant byte address 0x0 - dummy sync flag']
  #allocation25 [shape = 's32[]', space=sflag, size = 0x4, offset = 0, fixed_abs, tag = 'sflag constant byte address 0x0 - dummy sync flag']
  %s0 = inlined_call_operand.hbm [shape: s32[8], index: 0, kind: input, shape index: {}]
  %s1 = inlined_call_operand.vmem [shape: s32[8], index: 1, kind: input, shape index: {}]
  %s2 = inlined_call_operand.vmem [shape: s32[32], index: 2, kind: input, shape index: {}]
  %s3 = inlined_call_operand.hbm [shape: f32[64,128], index: 3, kind: input, shape index: {}]
  %s4 = inlined_call_operand.hbm [shape: f32[1,8,128], index: 4, kind: output, shape index: {}]
  %s5 = sld [smem:[#allocation0]]
  $region48: #{tpu_custom_call.1} parent=0
    _
  %s7 = ssub.s32 1, %s5
  %s8 = scalar_select 0, %s7, %s5
  %10 = dma.hbm_to_smem %s0, 16, [#allocation7], [#allocation6]
  %s11 = sshll.u32 %s1, 4
  %s12 = int_to_ptr.vmem [resolvable:$true] %s11
  %14 = dma.vmem_to_smem %s12, 16, [#allocation8], [#allocation6]
  %s15 = sshll.u32 %s2, 4
  %s16 = int_to_ptr.vmem [resolvable:$true] %s15
  %18 = dma.vmem_to_smem %s16, 16, [#allocation9], [#allocation6]
  %19 = dma.done [#allocation6], 48
  %20 = sfence
  $region1: #{tpu_custom_call.1} parent=0
    #allocation10 [shape = 'u8[4096]{0}', space=vmem, size = 0x1000, scoped, tag = 'output window, operand 0, single buffered']
    #allocation11 [shape = 's32[1]{0}', space=sflag, size = 0x4, scoped, tag = 'scoped memory for tpu_custom_call.1']
    %21 = vsyncpa [#allocation11], 0
    %s22 = smul.u32 0, 8
    loop: start=0, step=1, limit=8
    $region2: #{tpu_custom_call.1} parent=1 // loop_pre_header
      _
    $region3: #{tpu_custom_call.1} parent=1 // loop_header
      %s24 = sphi 0, %s28
      %p25 = scmp.ge.s32.totalorder %s24, 8
    $region4: #{tpu_custom_call.1} parent=1 // loop_header_branch
      %27 = sbr.rel (%p25) target = $region8
    $region5: #{tpu_custom_call.1} parent=1 // loop_body
      %s29 = sadd.s32 %s22, %s24
      %s30 = sld [smem:[#allocation7 + %s29]]
      %s31 = smul.addr %s30, 16
      %s32 = scalar_lea.hbm %s3, %s31
      %s33 = scalar_lea.vmem [#allocation2], %s24
      // Predicated region
      $region9: #{tpu_custom_call.1} parent=5 // pred_check
        _
      $region10: #{tpu_custom_call.1} parent=5 // pred_check_branch
        %35 = sbr.rel target = $region12
      $region11: #{tpu_custom_call.1} parent=5 // pred_region
        %36 = sst [smem:[#allocation14]] [#allocation13]
        %37 = sst [smem:[#allocation15]] [#allocation12]
      $region12: #{tpu_custom_call.1} parent=5 // pred_fallthru
        _
      %39 = shalt.err (0)
      %s41 = sshll.u32 %s33, 4
      %s42 = int_to_ptr.vmem [resolvable:$true] %s41
      %44 = dma.hbm_to_vmem [thread:$0]  %s32, 16, %s42, [#allocation5]
      %s45 = sld [smem:[#allocation8 + %s29]]
      %s46 = smul.addr %s45, 16
      %s47 = scalar_lea.hbm %s3, %s46
      %s48 = scalar_lea.vmem [#allocation3], %s24
      %s49 = scalar_lea.sflag [#allocation5], 1
      // Predicated region
      $region13: #{tpu_custom_call.1} parent=5 // pred_check
        _
      $region14: #{tpu_custom_call.1} parent=5 // pred_check_branch
        %51 = sbr.rel target = $region16
      $region15: #{tpu_custom_call.1} parent=5 // pred_region
        %52 = sst [smem:[#allocation14]] [#allocation17]
        %53 = sst [smem:[#allocation15]] [#allocation16]
      $region16: #{tpu_custom_call.1} parent=5 // pred_fallthru
        _
      %55 = shalt.err (0)
      %s57 = sshll.u32 %s48, 4
      %s58 = int_to_ptr.vmem [resolvable:$true] %s57
      %60 = dma.hbm_to_vmem [thread:$0]  %s47, 16, %s58, %s49
      %s61 = smul.u32 %s29, 4
      %s62 = sld [smem:[#allocation9 + %s61]]
      %s63 = smul.addr %s62, 16
      %s64 = scalar_lea.hbm %s3, %s63
      %s65 = scalar_lea.vmem [#allocation4], %s24
      %s66 = scalar_lea.sflag [#allocation5], 2
      // Predicated region
      $region17: #{tpu_custom_call.1} parent=5 // pred_check
        _
      $region18: #{tpu_custom_call.1} parent=5 // pred_check_branch
        %68 = sbr.rel target = $region20
      $region19: #{tpu_custom_call.1} parent=5 // pred_region
        %69 = sst [smem:[#allocation14]] [#allocation19]
        %70 = sst [smem:[#allocation15]] [#allocation18]
      $region20: #{tpu_custom_call.1} parent=5 // pred_fallthru
        _
      %72 = shalt.err (0)
      %s74 = sshll.u32 %s65, 4
      %s75 = int_to_ptr.vmem [resolvable:$true] %s74
      %77 = dma.hbm_to_vmem [thread:$0]  %s64, 16, %s75, %s66
      %s78 = sadd.s32 %s61, 1
      %s79 = sld [smem:[#allocation9 + %s78]]
      %s80 = smul.addr %s79, 16
      %s81 = scalar_lea.hbm %s3, %s80
      %s82 = sadd.s32 %s24, 8
      %s83 = scalar_lea.vmem [#allocation4], %s82
      %s84 = scalar_lea.sflag [#allocation5], 3
      // Predicated region
      $region21: #{tpu_custom_call.1} parent=5 // pred_check
        _
      $region22: #{tpu_custom_call.1} parent=5 // pred_check_branch
        %86 = sbr.rel target = $region24
      $region23: #{tpu_custom_call.1} parent=5 // pred_region
        %87 = sst [smem:[#allocation14]] [#allocation21]
        %88 = sst [smem:[#allocation15]] [#allocation20]
      $region24: #{tpu_custom_call.1} parent=5 // pred_fallthru
        _
      %90 = shalt.err (0)
      %s92 = sshll.u32 %s83, 4
      %s93 = int_to_ptr.vmem [resolvable:$true] %s92
      %95 = dma.hbm_to_vmem [thread:$0]  %s81, 16, %s93, %s84
      %s96 = sadd.s32 %s61, 2
      %s97 = sld [smem:[#allocation9 + %s96]]
      %s98 = smul.addr %s97, 16
      %s99 = scalar_lea.hbm %s3, %s98
      %s100 = sadd.s32 %s24, 16
      %s101 = scalar_lea.vmem [#allocation4], %s100
      %s102 = scalar_lea.sflag [#allocation5], 4
      // Predicated region
      $region25: #{tpu_custom_call.1} parent=5 // pred_check
        _
      $region26: #{tpu_custom_call.1} parent=5 // pred_check_branch
        %104 = sbr.rel target = $region28
      $region27: #{tpu_custom_call.1} parent=5 // pred_region
        %105 = sst [smem:[#allocation14]] [#allocation23]
        %106 = sst [smem:[#allocation15]] [#allocation22]
      $region28: #{tpu_custom_call.1} parent=5 // pred_fallthru
        _
      %108 = shalt.err (0)
      %s110 = sshll.u32 %s101, 4
      %s111 = int_to_ptr.vmem [resolvable:$true] %s110
      %113 = dma.hbm_to_vmem [thread:$0]  %s99, 16, %s111, %s102
      %s114 = sadd.s32 %s61, 3
      %s115 = sld [smem:[#allocation9 + %s114]]
      %s116 = smul.addr %s115, 16
      %s117 = scalar_lea.hbm %s3, %s116
      %s118 = sadd.s32 %s24, 24
      %s119 = scalar_lea.vmem [#allocation4], %s118
      %s120 = scalar_lea.sflag [#allocation5], 5
      // Predicated region
      $region29: #{tpu_custom_call.1} parent=5 // pred_check
        _
      $region30: #{tpu_custom_call.1} parent=5 // pred_check_branch
        %122 = sbr.rel target = $region32
      $region31: #{tpu_custom_call.1} parent=5 // pred_region
        %123 = sst [smem:[#allocation14]] [#allocation25]
        %124 = sst [smem:[#allocation15]] [#allocation24]
      $region32: #{tpu_custom_call.1} parent=5 // pred_fallthru
        _
      %126 = shalt.err (0)
      %s128 = sshll.u32 %s119, 4
      %s129 = int_to_ptr.vmem [resolvable:$true] %s128
      %131 = dma.hbm_to_vmem [thread:$0]  %s117, 16, %s129, %s120
    $region6: #{tpu_custom_call.1} parent=1 // loop_footer
      %s28 = sadd.s32 1, %s24
    $region7: #{tpu_custom_call.1} parent=1 // loop_footer_branch
      %23 = sbr.rel target = $region3
    $region8: #{tpu_custom_call.1} parent=1 // loop_exit
      _
    loop: start=0, step=1, limit=8
    $region33: #{tpu_custom_call.1} parent=1 // loop_pre_header
      _
    $region34: #{tpu_custom_call.1} parent=1 // loop_header
      %s133 = sphi 0, %s137
      %p134 = scmp.ge.s32.totalorder %s133, 8
    $region35: #{tpu_custom_call.1} parent=1 // loop_header_branch
      %136 = sbr.rel (%p134) target = $region39
    $region36: #{tpu_custom_call.1} parent=1 // loop_body
      %s138 = smul.u32 1, 1
      %s139 = sshll.u32 %s138, 4
      %140 = dma.done [#allocation5], %s139
      %s141 = scalar_lea.sflag [#allocation5], 1
      %s142 = sshll.u32 %s138, 4
      %143 = dma.done %s141, %s142
      %s144 = scalar_lea.sflag [#allocation5], 2
      %s145 = sshll.u32 %s138, 4
      %146 = dma.done %s144, %s145
      %s147 = scalar_lea.sflag [#allocation5], 3
      %s148 = sshll.u32 %s138, 4
      %149 = dma.done %s147, %s148
      %s150 = scalar_lea.sflag [#allocation5], 4
      %s151 = sshll.u32 %s138, 4
      %152 = dma.done %s150, %s151
      %s153 = scalar_lea.sflag [#allocation5], 5
      %s154 = sshll.u32 %s138, 4
      %155 = dma.done %s153, %s154
    $region37: #{tpu_custom_call.1} parent=1 // loop_footer
      %s137 = sadd.s32 1, %s133
    $region38: #{tpu_custom_call.1} parent=1 // loop_footer_branch
      %132 = sbr.rel target = $region34
    $region39: #{tpu_custom_call.1} parent=1 // loop_exit
      _
    %v156 = vld [vmem:[#allocation2] sm:$0xff]
    %v157 = vld [vmem:[#allocation3] sm:$0xff]
    %v158 = vmul.f32 %v156, %v157
    %159 = vadd.xlane.f32.xlu0 %v158
    %v160 = vpop.xlane.xlu0 %159
    %v161 = vmin.f32 %v160, 0.0
    %v162 = vand.u32 2147483647, %v160
    %v163 = vsub.f32 0.0, %v162
    %v164 = vmul.f32 %v163, 1.442695
    %v165 = vpow.pop %v164
    %v166 = vadd.f32 %v165, 1.0
    %v167 = vlog2.pop %v166
    %v168 = vmul.f32 %v167, 0.6931472
    %v169 = vmul.f32 -0.5, %v165
    %v170 = vadd.f32 %v169, 1.0
    %v171 = vmul.f32 %v170, %v165
    %v172 = vand.u32 2147483647, %v165
    %vm173 = vcmp.lt.f32.partialorder %v172, 0.0004427343
    %v174 = vsel %vm173, %v171, %v168
    %v175 = vsub.f32 %v161, %v174
    %v176 = vld [vmem:[#allocation4] sm:$0xff]
    %v177 = vld [vmem:[#allocation4 + $0x8] sm:$0xff]
    %v178 = vld [vmem:[#allocation4 + $0x10] sm:$0xff]
    %v179 = vld [vmem:[#allocation4 + $0x18] sm:$0xff]
    %v180 = vadd.f32 %v176, %v177
    %v181 = vadd.f32 %v180, %v178
    %v182 = vadd.f32 %v181, %v179
    %v183 = vmul.f32 %v156, %v182
    %184 = vadd.xlane.f32.xlu0 %v183
    %v185 = vpop.xlane.xlu0 %184
    %v186 = vsub.f32 0.0, %v185
    %v187 = vmin.f32 %v186, 0.0
    %v188 = vand.u32 2147483647, %v186
    %v189 = vsub.f32 0.0, %v188
    %v190 = vmul.f32 %v189, 1.442695
    %v191 = vpow.pop %v190
    %v192 = vadd.f32 %v191, 1.0
    %v193 = vlog2.pop %v192
    %v194 = vmul.f32 %v193, 0.6931472
    %v195 = vmul.f32 -0.5, %v191
    %v196 = vadd.f32 %v195, 1.0
    %v197 = vmul.f32 %v196, %v191
    %v198 = vand.u32 2147483647, %v191
    %vm199 = vcmp.lt.f32.partialorder %v198, 0.0004427343
    %v200 = vsel %vm199, %v197, %v194
    %v201 = vsub.f32 %v187, %v200
    %v202 = vadd.f32 %v175, %v201
    %v203 = vlaneseq
    %v204 = vshrl.u32 %v203, 7
    %v205 = vstv %s22
    %v206 = vadd.s32 %v205, %v204
    %vm207 = vcmp.lt.s32.totalorder %v206, 8
    %v208 = vsel %vm207, %v202, 0.0
    %vm209 = vcmask 7168
    %v210 = vsel %vm209, %v208, 0.0
    %211 = vadd.xlane.f32.xlu0 %v210
    %v212 = vpop.xlane.xlu0 %211
    %v213 = vrot.slane %v212, 4
    %v214 = vadd.f32 %v212, %v213
    %v215 = vrot.slane %v214, 2
    %v216 = vadd.f32 %v214, %v215
    %v217 = vrot.slane %v216, 1
    %v218 = vadd.f32 %v216, %v217
    %s219 = vtos %v218
    %v220 = vstv %s219
    %221 = vst [vmem:[#allocation10] sm:$0xff] %v220
    // Predicated region
    $region40: #{tpu_custom_call.1} parent=1 // pred_check
      _
    $region41: #{tpu_custom_call.1} parent=1 // pred_check_branch
      %223 = sbr.rel (0) target = $region43
    $region42: #{tpu_custom_call.1} parent=1 // pred_region
      %s225 = ssub.s32 128, 128
      %226 = vsyncadd [#allocation11], %s225
      %s228 = sshll.u32 [#allocation10], 4
      %s229 = int_to_ptr.vmem [resolvable:$true] %s228
      %231 = dma.vmem_to_hbm [thread:$0]  %s229, 128, %s4, [#allocation11]
    $region43: #{tpu_custom_call.1} parent=1 // pred_fallthru
      _
    // Predicated region
    $region44: #{tpu_custom_call.1} parent=1 // pred_check
      _
    $region45: #{tpu_custom_call.1} parent=1 // pred_check_branch
      %233 = sbr.rel (0) target = $region47
    $region46: #{tpu_custom_call.1} parent=1 // pred_region
      %234 = dma.done [#allocation11], 128
    $region47: #{tpu_custom_call.1} parent=1 // pred_fallthru
      _
    %235 = vsyncpa [#allocation11], 1
  %236 = vsyncmov [#allocation5]
  %s237 = vpop.sfrf %236
  %p238 = scmp.eq.s32.totalorder %s237, 0
  %p239 = pneg %p238
  %241 = shalt.err (%p239)
  %s242 = scalar_lea.sflag [#allocation5], 1
  %243 = vsyncmov %s242
  %s244 = vpop.sfrf %243
  %p245 = scmp.eq.s32.totalorder %s244, 0
  %p246 = pneg %p245
  %248 = shalt.err (%p246)
  %s249 = scalar_lea.sflag [#allocation5], 2
  %250 = vsyncmov %s249
  %s251 = vpop.sfrf %250
  %p252 = scmp.eq.s32.totalorder %s251, 0
  %p253 = pneg %p252
  %255 = shalt.err (%p253)
  %s256 = scalar_lea.sflag [#allocation5], 3
  %257 = vsyncmov %s256
  %s258 = vpop.sfrf %257
  %p259 = scmp.eq.s32.totalorder %s258, 0
  %p260 = pneg %p259
  %262 = shalt.err (%p260)
  %s263 = scalar_lea.sflag [#allocation5], 4
  %264 = vsyncmov %s263
  %s265 = vpop.sfrf %264
  %p266 = scmp.eq.s32.totalorder %s265, 0
  %p267 = pneg %p266
  %269 = shalt.err (%p267)
  %s270 = scalar_lea.sflag [#allocation5], 5
  %271 = vsyncmov %s270
  %s272 = vpop.sfrf %271
  %p273 = scmp.eq.s32.totalorder %s272, 0
  %p274 = pneg %p273
  %276 = shalt.err (%p274)

</llo_original>
